<compile_context>
chip_gen: v6e
topology: v6e:2x2x1
jax: 0.10.0
libtpu: 0.0.40
codegen_flags: <defaults>
</compile_context>

<pallas_src>
import jax
import jax.numpy as jnp
from jax.experimental import pallas as pl
from jax.experimental.pallas import tpu as pltpu


def _mul_conv1x1_kernel(w_ref, s_ref, x_ref, o_ref):
    # Fold the per-input-channel SE scale into this weight slab (broadcast over
    # the Cout rows), then one MXU matmul: (tCout, Cin) @ (Cin, HW) -> (tCout, HW).
    w_scaled = w_ref[...] * s_ref[...]
    o_ref[...] = jnp.dot(
        w_scaled, x_ref[...], preferred_element_type=jnp.float32
    ).astype(o_ref.dtype)


def mul_conv1x1(x_nchw, scale_nc11, weight_oihw):
    """Equivalent of: y = Conv2d(Cin, Cout, 1, bias=False)(x * scale).

    x_nchw     : (N, Cin, H, W)   (N must be 1, as in the reference module)
    scale_nc11 : (N, Cin, 1, 1)
    weight_oihw: (Cout, Cin, 1, 1)
    returns    : (N, Cout, H, W)
    """
    N, Cin, H, W = x_nchw.shape
    Cout = weight_oihw.shape[0]
    assert N == 1, "reference module uses batch 1"
    HW = H * W

    # Layout plumbing: pure reshapes, no transposes / extra HBM traffic.
    x2d = x_nchw.reshape(Cin, HW)            # (Cin, HW)
    s2d = scale_nc11.reshape(1, Cin)         # (1, Cin)
    w2d = weight_oihw.reshape(Cout, Cin)     # (Cout, Cin)

    # Split the Cout axis across a small "parallel" grid (2 blocks) so the two
    # TensorCores of a v7x chip each take half the output channels. Block rows
    # must stay a multiple of 8 (sublane constraint).
    if Cout % 2 == 0 and (Cout // 2) % 8 == 0:
        n_blocks = 2
    else:
        n_blocks = 1
    t_cout = Cout // n_blocks

    cost = pl.CostEstimate(
        flops=2 * HW * Cin * Cout,
        transcendentals=0,
        bytes_accessed=(Cin * HW + Cout * Cin + Cin + Cout * HW) * 4,
    )

    out2d = pl.pallas_call(
        _mul_conv1x1_kernel,
        out_shape=jax.ShapeDtypeStruct((Cout, HW), x_nchw.dtype),
        grid=(n_blocks,),
        in_specs=[
            pl.BlockSpec((t_cout, Cin), lambda i: (i, 0)),  # weight slab per block
            pl.BlockSpec((1, Cin), lambda i: (0, 0)),       # SE scale (shared)
            pl.BlockSpec((Cin, HW), lambda i: (0, 0)),      # activations (shared)
        ],
        out_specs=pl.BlockSpec((t_cout, HW), lambda i: (i, 0)),
        compiler_params=pltpu.CompilerParams(
            dimension_semantics=("parallel",),
        ),
        cost_estimate=cost,
    )(w2d, s2d, x2d)

    # (Cout, HW) -> (N, Cout, H, W): plain reshape, no transpose.
    return out2d.reshape(N, Cout, H, W)


if __name__ == "__main__":
    key = jax.random.PRNGKey(0)
    k1, k2, k3 = jax.random.split(key, 3)

    N, Cin, H, W, Cout = 1, 672, 14, 14, 112

    x211 = jax.random.normal(k1, (N, Cin, H, W), dtype=jnp.float32)
    x216 = jax.random.normal(k2, (N, Cin, 1, 1), dtype=jnp.float32)
    # deterministic Conv2d weight (shape from module: (112, 672, 1, 1))
    weight = jax.random.normal(k3, (Cout, Cin, 1, 1), dtype=jnp.float32) * 0.02

    out = mul_conv1x1(x211, x216, weight)
    jax.block_until_ready(out)

    # reference check in plain JAX
    ref = jnp.einsum(
        "nchw,oc->nohw", x211 * x216, weight.reshape(Cout, Cin)
    )
    assert out.shape == (N, Cout, H, W)
    assert jnp.allclose(out, ref, atol=1e-4, rtol=1e-4)

    print("KERNEL_OK")
</pallas_src>

<mosaic_0001>
module attributes {stable_mosaic.version = 11 : i64} {
  func.func @_mul_conv1x1_kernel(%arg0: i32, %arg1: memref<56x672xf32, #tpu.memory_space<vmem>>, %arg2: memref<1x672xf32, #tpu.memory_space<vmem>>, %arg3: memref<672x196xf32, #tpu.memory_space<vmem>>, %arg4: memref<56x196xf32, #tpu.memory_space<vmem>>) attributes {dimension_semantics = [#tpu.dimension_semantics<parallel>], iteration_bounds = array<i64: 2>, scalar_prefetch = 0 : i64, scratch_operands = 0 : i64, tpu.core_type = #tpu.core_type<tc>, window_params = [{transform_indices = @transform_0, window_bounds = array<i64: 56, 672>}, {pipeline_mode = #tpu.pipeline_mode<synchronous>, transform_indices = @transform_1, window_bounds = array<i64: 1, 672>}, {pipeline_mode = #tpu.pipeline_mode<synchronous>, transform_indices = @transform_2, window_bounds = array<i64: 672, 196>}, {transform_indices = @transform_3, window_bounds = array<i64: 56, 196>}]} {
    %c0 = arith.constant 0 : index
    %c0_0 = arith.constant 0 : index
    %0 = vector.load %arg1[%c0, %c0_0] : memref<56x672xf32, #tpu.memory_space<vmem>>, vector<56x672xf32>
    %c0_1 = arith.constant 0 : index
    %c0_2 = arith.constant 0 : index
    %1 = vector.load %arg2[%c0_1, %c0_2] : memref<1x672xf32, #tpu.memory_space<vmem>>, vector<1x672xf32>
    %2 = vector.broadcast %1 : vector<1x672xf32> to vector<56x672xf32>
    %3 = arith.mulf %0, %2 : vector<56x672xf32>
    %c0_3 = arith.constant 0 : index
    %c0_4 = arith.constant 0 : index
    %4 = vector.load %arg3[%c0_3, %c0_4] : memref<672x196xf32, #tpu.memory_space<vmem>>, vector<672x196xf32>
    %cst = arith.constant dense<0.000000e+00> : vector<56x196xf32>
    %5 = tpu.matmul %3, %4, %cst {dimension_numbers = #tpu.dot_dimension_numbers<[1], [0], [0], [1], [0, 0, 1, 1], [], []>} : vector<56x672xf32>, vector<672x196xf32>, vector<56x196xf32> -> vector<56x196xf32>
    %c0_5 = arith.constant 0 : index
    %c0_6 = arith.constant 0 : index
    %6 = vector.load %arg4[%c0_5, %c0_6] : memref<56x196xf32, #tpu.memory_space<vmem>>, vector<56x196xf32>
    tpu.vector_store %arg4[%c0_5, %c0_6], %5 {strides = array<i32>} : memref<56x196xf32, #tpu.memory_space<vmem>>, vector<56x196xf32>,
    return
  }
  func.func @transform_0(%arg0: i32) -> (i32, i32) {
    %c0_i32 = arith.constant 0 : i32
    %c0_i32_0 = arith.constant 0 : i32
    return %arg0, %c0_i32 : i32, i32
  }
  func.func @transform_1(%arg0: i32) -> (i32, i32) {
    %c0_i32 = arith.constant 0 : i32
    %c0_i32_0 = arith.constant 0 : i32
    %c0_i32_1 = arith.constant 0 : i32
    return %c0_i32, %c0_i32_0 : i32, i32
  }
  func.func @transform_2(%arg0: i32) -> (i32, i32) {
    %c0_i32 = arith.constant 0 : i32
    %c0_i32_0 = arith.constant 0 : i32
    %c0_i32_1 = arith.constant 0 : i32
    return %c0_i32, %c0_i32_0 : i32, i32
  }
  func.func @transform_3(%arg0: i32) -> (i32, i32) {
    %c0_i32 = arith.constant 0 : i32
    %c0_i32_0 = arith.constant 0 : i32
    return %arg0, %c0_i32 : i32, i32
  }
}

</mosaic_0001>

<llo_original>
// kernel: tpu_custom_call.1
$region0: #{tpu_custom_call.1}
  #allocation0 [shape = 'u32[]', space=smem, size = 0x4, offset = 0x4, fixed_abs, tag = 'smem constant byte address 0x4 - core index']
  #allocation1 [shape = 'u32[144,128]{1,0:T(1,128)}', space=vmem, size = 0x12000, scoped, tag = 'internal scratch']
  %s0 = inlined_call_operand.vmem [shape: f32[112,672], index: 0, kind: input, shape index: {}]
  %s1 = inlined_call_operand.vmem [shape: f32[1,672], index: 1, kind: input, shape index: {}]
  %s2 = inlined_call_operand.vmem [shape: f32[672,196], index: 2, kind: input, shape index: {}]
  %s3 = inlined_call_operand.vmem [shape: f32[112,196], index: 3, kind: output, shape index: {}]
  %s4 = sld [smem:[#allocation0]]
  $region45: #{tpu_custom_call.1} parent=0
    _
  %s6 = ssub.s32 1, %s4
  %s7 = scalar_select 0, %s6, %s4
  loop: start=0, step=1, limit=4
  $region2: #{tpu_custom_call.1} parent=0 // loop_pre_header
    _
  $region3: #{tpu_custom_call.1} parent=0 // loop_header
    %s9 = sphi 0, %s13
    %p10 = scmp.ge.s32.totalorder %s9, 4
    %s19 = sphi 0, %s21
    %s22 = sphi 0, %s19
    %s23 = sphi 0, %s22
    %s39 = sphi 0, %s23
    %s43 = sphi 0, %s43
    %s45 = sphi 0, %s43
    %s46 = sphi 0, %s45
    %s60 = sphi 0, %s46
    %s64 = sphi 0, %s64
    %s66 = sphi 0, %s64
    %s67 = sphi 0, %s66
    %s81 = sphi 0, %s67
    %s87 = sphi 0, %s89
    %s90 = sphi 0, %s87
    %s91 = sphi 0, %s90
    %s107 = sphi 0, %s91
  $region4: #{tpu_custom_call.1} parent=0 // loop_header_branch
    %12 = sbr.rel (%p10) target = $region8
  $region5: #{tpu_custom_call.1} parent=0 // loop_body
    %s14 = ssub.s32 %s9, 1
    %s15 = ssub.s32 %s9, 2
    %s16 = sadd.s32 %s9, 1
    %s17 = ssub.s32 %s9, %s16
    %p18 = scmp.eq.s32.totalorder %s17, 0
    %s20 = sadd.s32 %s19, 1
    %s21 = scalar_select %p18, %s19, %s20
    %p24 = pneg %p18
    %p25 = scmp.eq.s32.totalorder %s9, 1
    %p26 = por %p24, %p25
    %p27 = scmp.ne.s32.totalorder %s19, %s22
    %p28 = scmp.eq.s32.totalorder %s9, 0
    %p29 = por %p27, %p28
    %p30 = scmp.ne.s32.totalorder %s19, %s22
    %p31 = scmp.eq.s32.totalorder %s14, 1
    %p32 = por %p30, %p31
    %p33 = scmp.ne.s32.totalorder %s22, %s23
    %p34 = scmp.eq.s32.totalorder %s14, 0
    %p35 = por %p33, %p34
    %p36 = scmp.ne.s32.totalorder %s22, %s23
    %p37 = scmp.eq.s32.totalorder %s15, 1
    %p38 = por %p36, %p37
    %p40 = scmp.ne.s32.totalorder %s23, %s39
    %p41 = scmp.eq.s32.totalorder %s15, 0
    %p42 = por %p40, %p41
    %s44 = sadd.s32 %s43, 1
    %p47 = scmp.eq.s32.totalorder %s9, 1
    %p48 = scmp.ne.s32.totalorder %s43, %s45
    %p49 = scmp.eq.s32.totalorder %s9, 0
    %p50 = por %p48, %p49
    %p51 = scmp.ne.s32.totalorder %s43, %s45
    %p52 = scmp.eq.s32.totalorder %s14, 1
    %p53 = por %p51, %p52
    %p54 = scmp.ne.s32.totalorder %s45, %s46
    %p55 = scmp.eq.s32.totalorder %s14, 0
    %p56 = por %p54, %p55
    %p57 = scmp.ne.s32.totalorder %s45, %s46
    %p58 = scmp.eq.s32.totalorder %s15, 1
    %p59 = por %p57, %p58
    %p61 = scmp.ne.s32.totalorder %s46, %s60
    %p62 = scmp.eq.s32.totalorder %s15, 0
    %p63 = por %p61, %p62
    %s65 = sadd.s32 %s64, 1
    %p68 = scmp.eq.s32.totalorder %s9, 1
    %p69 = scmp.ne.s32.totalorder %s64, %s66
    %p70 = scmp.eq.s32.totalorder %s9, 0
    %p71 = por %p69, %p70
    %p72 = scmp.ne.s32.totalorder %s64, %s66
    %p73 = scmp.eq.s32.totalorder %s14, 1
    %p74 = por %p72, %p73
    %p75 = scmp.ne.s32.totalorder %s66, %s67
    %p76 = scmp.eq.s32.totalorder %s14, 0
    %p77 = por %p75, %p76
    %p78 = scmp.ne.s32.totalorder %s66, %s67
    %p79 = scmp.eq.s32.totalorder %s15, 1
    %p80 = por %p78, %p79
    %p82 = scmp.ne.s32.totalorder %s67, %s81
    %p83 = scmp.eq.s32.totalorder %s15, 0
    %p84 = por %p82, %p83
    %s85 = ssub.s32 %s9, %s16
    %p86 = scmp.eq.s32.totalorder %s85, 0
    %s88 = sadd.s32 %s87, 1
    %s89 = scalar_select %p86, %s87, %s88
    %p92 = pneg %p86
    %p93 = scmp.eq.s32.totalorder %s9, 1
    %p94 = por %p92, %p93
    %p95 = scmp.ne.s32.totalorder %s87, %s90
    %p96 = scmp.eq.s32.totalorder %s9, 0
    %p97 = por %p95, %p96
    %p98 = scmp.ne.s32.totalorder %s87, %s90
    %p99 = scmp.eq.s32.totalorder %s14, 1
    %p100 = por %p98, %p99
    %p101 = scmp.ne.s32.totalorder %s90, %s91
    %p102 = scmp.eq.s32.totalorder %s14, 0
    %p103 = por %p101, %p102
    %p104 = scmp.ne.s32.totalorder %s90, %s91
    %p105 = scmp.eq.s32.totalorder %s15, 1
    %p106 = por %p104, %p105
    %p108 = scmp.ne.s32.totalorder %s91, %s107
    %p109 = scmp.eq.s32.totalorder %s15, 0
    %p110 = por %p108, %p109
    %p111 = scmp.le.s32.totalorder 1, %s9
    %p112 = scmp.lt.s32.totalorder %s9, 3
    %p113 = pnand %p111, %p112
    %p114 = pneg %p113
    // Predicated region
    $region9: #{tpu_custom_call.1} parent=5 // pred_check
      _
    $region10: #{tpu_custom_call.1} parent=5 // pred_check_branch
      %116 = sbr.rel (%p113) target = $region12
    $region11: #{tpu_custom_call.1} parent=5 // pred_region
      %s117 = ssub.s32 %s9, 1
      // Predicated region
      $region13: #{tpu_custom_call.1} parent=11 // pred_check
        %p118 = pneg %p56
      $region14: #{tpu_custom_call.1} parent=11 // pred_check_branch
        %120 = sbr.rel (%p118) target = $region16
      $region15: #{tpu_custom_call.1} parent=11 // pred_region
        _
      $region16: #{tpu_custom_call.1} parent=11 // pred_fallthru
        _
      // Predicated region
      $region17: #{tpu_custom_call.1} parent=11 // pred_check
        %p121 = pneg %p77
      $region18: #{tpu_custom_call.1} parent=11 // pred_check_branch
        %123 = sbr.rel (%p121) target = $region20
      $region19: #{tpu_custom_call.1} parent=11 // pred_region
        _
      $region20: #{tpu_custom_call.1} parent=11 // pred_fallthru
        _
    $region12: #{tpu_custom_call.1} parent=5 // pred_fallthru
      _
    %p124 = scmp.lt.s32.totalorder %s9, 2
    // Predicated region
    $region21: #{tpu_custom_call.1} parent=5 // pred_check
      %p125 = pneg %p124
    $region22: #{tpu_custom_call.1} parent=5 // pred_check_branch
      %127 = sbr.rel (%p125) target = $region24
    $region23: #{tpu_custom_call.1} parent=5 // pred_region
      // Predicated region
      $region25: #{tpu_custom_call.1} parent=23 // pred_check
        %p128 = pneg %p29
      $region26: #{tpu_custom_call.1} parent=23 // pred_check_branch
        %130 = sbr.rel (%p128) target = $region28
      $region27: #{tpu_custom_call.1} parent=23 // pred_region
        %s131 = smul.u32 7, %s9
        %p132 = scmp.lt.s32.totalorder %s131, 13
        %s133 = scalar_select %p132, %s131, 13
        %s134 = smul.addr %s133, 6
        %s135 = smul.addr %s134, 8
        %s136 = scalar_lea.vmem %s0, %s135
        %s137 = smul.u32 7, %s9
      $region28: #{tpu_custom_call.1} parent=23 // pred_fallthru
        _
    $region24: #{tpu_custom_call.1} parent=5 // pred_fallthru
      _
    %p138 = scmp.le.s32.totalorder 1, %s9
    %p139 = scmp.lt.s32.totalorder %s9, 3
    %p140 = pnand %p138, %p139
    %p141 = pneg %p140
    // Predicated region
    $region29: #{tpu_custom_call.1} parent=5 // pred_check
      _
    $region30: #{tpu_custom_call.1} parent=5 // pred_check_branch
      %143 = sbr.rel (%p140) target = $region32
    $region31: #{tpu_custom_call.1} parent=5 // pred_region
      %s144 = ssub.s32 %s9, 1
      %s145 = smul.u32 7, %s14
      %p146 = scmp.lt.s32.totalorder %s145, 13
      %s147 = scalar_select %p146, %s145, 13
      %s148 = smul.addr %s147, 6
      %s149 = smul.addr %s148, 8
      %s150 = scalar_lea.vmem %s0, %s149
      %p151 = pneg %p35
      %p152 = pneg %p32
      %p153 = pneg %p56
      %p154 = pneg %p53
      %p155 = pneg %p77
      %p156 = pneg %p74
      %p157 = pneg %p103
      %p158 = pneg %p100
      %s159 = smul.u32 7, %s14
      %p160 = scmp.lt.s32.totalorder %s159, 13
      %s161 = scalar_select %p160, %s159, 13
      %s162 = smul.addr %s161, 2
      %s163 = smul.addr %s162, 8
      %s164 = scalar_lea.vmem %s3, %s163
      %s165 = smul.u32 7, %s14
      %p166 = scmp.lt.s32.totalorder %s165, 13
      %s167 = scalar_select %p166, %s165, 13
      %s168 = smul.addr %s167, 6
      %s169 = smul.addr %s168, 8
      %s170 = scalar_lea.vmem %s0, %s169
      %s171 = smul.u32 7, %s14
      %s172 = smul.u32 7, %s14
      %p173 = scmp.lt.s32.totalorder %s172, 13
      %s174 = scalar_select %p173, %s172, 13
      %s175 = smul.addr %s174, 2
      %s176 = smul.addr %s175, 8
      %s177 = scalar_lea.vmem %s3, %s176
      %s178 = smul.u32 7, %s14
      %v179 = vld [vmem:[%s170] sm:$0xff]
      %v180 = vld [vmem:[%s170 + $0x8] sm:$0xff]
      %v181 = vld [vmem:[%s170 + $0x10] sm:$0xff]
      %v182 = vld [vmem:[%s170 + $0x18] sm:$0xff]
      %v183 = vld [vmem:[%s170 + $0x20] sm:$0xff]
      %v184 = vld [vmem:[%s170 + $0x28] sm:$0xff]
      %v185 = vld [vmem:[%s170 + $0x30] sm:$0xff]
      %v186 = vld [vmem:[%s170 + $0x38] sm:$0xff]
      %v187 = vld [vmem:[%s170 + $0x40] sm:$0xff]
      %v188 = vld [vmem:[%s170 + $0x48] sm:$0xff]
      %v189 = vld [vmem:[%s170 + $0x50] sm:$0xff]
      %v190 = vld [vmem:[%s170 + $0x58] sm:$0xff]
      %v191 = vld [vmem:[%s170 + $0x60] sm:$0xff]
      %v192 = vld [vmem:[%s170 + $0x68] sm:$0xff]
      %v193 = vld [vmem:[%s170 + $0x70] sm:$0xff]
      %v194 = vld [vmem:[%s170 + $0x78] sm:$0xff]
      %v195 = vld [vmem:[%s170 + $0x80] sm:$0xff]
      %v196 = vld [vmem:[%s170 + $0x88] sm:$0xff]
      %v197 = vld [vmem:[%s170 + $0x90] sm:$0xff]
      %v198 = vld [vmem:[%s170 + $0x98] sm:$0xff]
      %v199 = vld [vmem:[%s170 + $0xa0] sm:$0xff]
      %v200 = vld [vmem:[%s170 + $0xa8] sm:$0xff]
      %v201 = vld [vmem:[%s170 + $0xb0] sm:$0xff]
      %v202 = vld [vmem:[%s170 + $0xb8] sm:$0xff]
      %v203 = vld [vmem:[%s170 + $0xc0] sm:$0xff]
      %v204 = vld [vmem:[%s170 + $0xc8] sm:$0xff]
      %v205 = vld [vmem:[%s170 + $0xd0] sm:$0xff]
      %v206 = vld [vmem:[%s170 + $0xd8] sm:$0xff]
      %v207 = vld [vmem:[%s170 + $0xe0] sm:$0xff]
      %v208 = vld [vmem:[%s170 + $0xe8] sm:$0xff]
      %v209 = vld [vmem:[%s170 + $0xf0] sm:$0xff]
      %v210 = vld [vmem:[%s170 + $0xf8] sm:$0xff]
      %v211 = vld [vmem:[%s170 + $0x100] sm:$0xff]
      %v212 = vld [vmem:[%s170 + $0x108] sm:$0xff]
      %v213 = vld [vmem:[%s170 + $0x110] sm:$0xff]
      %v214 = vld [vmem:[%s170 + $0x118] sm:$0xff]
      %v215 = vld [vmem:[%s170 + $0x120] sm:$0xff]
      %v216 = vld [vmem:[%s170 + $0x128] sm:$0xff]
      %v217 = vld [vmem:[%s170 + $0x130] sm:$0xff]
      %v218 = vld [vmem:[%s170 + $0x138] sm:$0xff]
      %v219 = vld [vmem:[%s170 + $0x140] sm:$0xff]
      %v220 = vld [vmem:[%s170 + $0x148] sm:$0xff]
      %v221 = vld [vmem:[%s1] sm:$0x3f]
      %v223 = vlaneseq
      %v224 = vshrl.u32 %v223, 7
      %v225 = vsub.s32 0, %v224
      %v226 = vrot.slane %v221, %v225
      %v227 = vlaneseq
      %v228 = vshrl.u32 %v227, 7
      %v229 = vsub.s32 1, %v228
      %v230 = vrot.slane %v221, %v229
      %v231 = vlaneseq
      %v232 = vshrl.u32 %v231, 7
      %v233 = vsub.s32 2, %v232
      %v234 = vrot.slane %v221, %v233
      %v235 = vlaneseq
      %v236 = vshrl.u32 %v235, 7
      %v237 = vsub.s32 3, %v236
      %v238 = vrot.slane %v221, %v237
      %v239 = vlaneseq
      %v240 = vshrl.u32 %v239, 7
      %v241 = vsub.s32 4, %v240
      %v242 = vrot.slane %v221, %v241
      %v243 = vlaneseq
      %v244 = vshrl.u32 %v243, 7
      %v245 = vsub.s32 5, %v244
      %v246 = vrot.slane %v221, %v245
      %v253 = vmul.f32 %v179, %v226
      %v254 = vmul.f32 %v180, %v230
      %v255 = vmul.f32 %v181, %v234
      %v256 = vmul.f32 %v182, %v238
      %v257 = vmul.f32 %v183, %v242
      %v258 = vmul.f32 %v184, %v246
      %v259 = vmul.f32 %v185, %v226
      %v260 = vmul.f32 %v186, %v230
      %v261 = vmul.f32 %v187, %v234
      %v262 = vmul.f32 %v188, %v238
      %v263 = vmul.f32 %v189, %v242
      %v264 = vmul.f32 %v190, %v246
      %v265 = vmul.f32 %v191, %v226
      %v266 = vmul.f32 %v192, %v230
      %v267 = vmul.f32 %v193, %v234
      %v268 = vmul.f32 %v194, %v238
      %v269 = vmul.f32 %v195, %v242
      %v270 = vmul.f32 %v196, %v246
      %v271 = vmul.f32 %v197, %v226
      %v272 = vmul.f32 %v198, %v230
      %v273 = vmul.f32 %v199, %v234
      %v274 = vmul.f32 %v200, %v238
      %v275 = vmul.f32 %v201, %v242
      %v276 = vmul.f32 %v202, %v246
      %v277 = vmul.f32 %v203, %v226
      %v278 = vmul.f32 %v204, %v230
      %v279 = vmul.f32 %v205, %v234
      %v280 = vmul.f32 %v206, %v238
      %v281 = vmul.f32 %v207, %v242
      %v282 = vmul.f32 %v208, %v246
      %v283 = vmul.f32 %v209, %v226
      %v284 = vmul.f32 %v210, %v230
      %v285 = vmul.f32 %v211, %v234
      %v286 = vmul.f32 %v212, %v238
      %v287 = vmul.f32 %v213, %v242
      %v288 = vmul.f32 %v214, %v246
      %v289 = vmul.f32 %v215, %v226
      %v290 = vmul.f32 %v216, %v230
      %v291 = vmul.f32 %v217, %v234
      %v292 = vmul.f32 %v218, %v238
      %v293 = vmul.f32 %v219, %v242
      %v294 = vmul.f32 %v220, %v246
      %v295 = vld [vmem:[%s2] sm:$0xff]
      %v296 = vld [vmem:[%s2 + $0x8] sm:$0xff]
      %v297 = vld [vmem:[%s2 + $0x10] sm:$0xff]
      %v298 = vld [vmem:[%s2 + $0x18] sm:$0xff]
      %v299 = vld [vmem:[%s2 + $0x20] sm:$0xff]
      %v300 = vld [vmem:[%s2 + $0x28] sm:$0xff]
      %v301 = vld [vmem:[%s2 + $0x30] sm:$0xff]
      %v302 = vld [vmem:[%s2 + $0x38] sm:$0xff]
      %v303 = vld [vmem:[%s2 + $0x40] sm:$0xff]
      %v304 = vld [vmem:[%s2 + $0x48] sm:$0xff]
      %v305 = vld [vmem:[%s2 + $0x50] sm:$0xff]
      %v306 = vld [vmem:[%s2 + $0x58] sm:$0xff]
      %v307 = vld [vmem:[%s2 + $0x60] sm:$0xff]
      %v308 = vld [vmem:[%s2 + $0x68] sm:$0xff]
      %v309 = vld [vmem:[%s2 + $0x70] sm:$0xff]
      %v310 = vld [vmem:[%s2 + $0x78] sm:$0xff]
      %v311 = vld [vmem:[%s2 + $0x80] sm:$0xff]
      %v312 = vld [vmem:[%s2 + $0x88] sm:$0xff]
      %v313 = vld [vmem:[%s2 + $0x90] sm:$0xff]
      %v314 = vld [vmem:[%s2 + $0x98] sm:$0xff]
      %v315 = vld [vmem:[%s2 + $0xa0] sm:$0xff]
      %v316 = vld [vmem:[%s2 + $0xa8] sm:$0xff]
      %v317 = vld [vmem:[%s2 + $0xb0] sm:$0xff]
      %v318 = vld [vmem:[%s2 + $0xb8] sm:$0xff]
      %v319 = vld [vmem:[%s2 + $0xc0] sm:$0xff]
      %v320 = vld [vmem:[%s2 + $0xc8] sm:$0xff]
      %v321 = vld [vmem:[%s2 + $0xd0] sm:$0xff]
      %v322 = vld [vmem:[%s2 + $0xd8] sm:$0xff]
      %v323 = vld [vmem:[%s2 + $0xe0] sm:$0xff]
      %v324 = vld [vmem:[%s2 + $0xe8] sm:$0xff]
      %v325 = vld [vmem:[%s2 + $0xf0] sm:$0xff]
      %v326 = vld [vmem:[%s2 + $0xf8] sm:$0xff]
      %v327 = vld [vmem:[%s2 + $0x100] sm:$0xff]
      %v328 = vld [vmem:[%s2 + $0x108] sm:$0xff]
      %v329 = vld [vmem:[%s2 + $0x110] sm:$0xff]
      %v330 = vld [vmem:[%s2 + $0x118] sm:$0xff]
      %v331 = vld [vmem:[%s2 + $0x120] sm:$0xff]
      %v332 = vld [vmem:[%s2 + $0x128] sm:$0xff]
      %v333 = vld [vmem:[%s2 + $0x130] sm:$0xff]
      %v334 = vld [vmem:[%s2 + $0x138] sm:$0xff]
      %v335 = vld [vmem:[%s2 + $0x140] sm:$0xff]
      %v336 = vld [vmem:[%s2 + $0x148] sm:$0xff]
      %v337 = vld [vmem:[%s2 + $0x150] sm:$0xff]
      %v338 = vld [vmem:[%s2 + $0x158] sm:$0xff]
      %v339 = vld [vmem:[%s2 + $0x160] sm:$0xff]
      %v340 = vld [vmem:[%s2 + $0x168] sm:$0xff]
      %v341 = vld [vmem:[%s2 + $0x170] sm:$0xff]
      %v342 = vld [vmem:[%s2 + $0x178] sm:$0xff]
      %v343 = vld [vmem:[%s2 + $0x180] sm:$0xff]
      %v344 = vld [vmem:[%s2 + $0x188] sm:$0xff]
      %v345 = vld [vmem:[%s2 + $0x190] sm:$0xff]
      %v346 = vld [vmem:[%s2 + $0x198] sm:$0xff]
      %v347 = vld [vmem:[%s2 + $0x1a0] sm:$0xff]
      %v348 = vld [vmem:[%s2 + $0x1a8] sm:$0xff]
      %v349 = vld [vmem:[%s2 + $0x1b0] sm:$0xff]
      %v350 = vld [vmem:[%s2 + $0x1b8] sm:$0xff]
      %v351 = vld [vmem:[%s2 + $0x1c0] sm:$0xff]
      %v352 = vld [vmem:[%s2 + $0x1c8] sm:$0xff]
      %v353 = vld [vmem:[%s2 + $0x1d0] sm:$0xff]
      %v354 = vld [vmem:[%s2 + $0x1d8] sm:$0xff]
      %v355 = vld [vmem:[%s2 + $0x1e0] sm:$0xff]
      %v356 = vld [vmem:[%s2 + $0x1e8] sm:$0xff]
      %v357 = vld [vmem:[%s2 + $0x1f0] sm:$0xff]
      %v358 = vld [vmem:[%s2 + $0x1f8] sm:$0xff]
      %v359 = vld [vmem:[%s2 + $0x200] sm:$0xff]
      %v360 = vld [vmem:[%s2 + $0x208] sm:$0xff]
      %v361 = vld [vmem:[%s2 + $0x210] sm:$0xff]
      %v362 = vld [vmem:[%s2 + $0x218] sm:$0xff]
      %v363 = vld [vmem:[%s2 + $0x220] sm:$0xff]
      %v364 = vld [vmem:[%s2 + $0x228] sm:$0xff]
      %v365 = vld [vmem:[%s2 + $0x230] sm:$0xff]
      %v366 = vld [vmem:[%s2 + $0x238] sm:$0xff]
      %v367 = vld [vmem:[%s2 + $0x240] sm:$0xff]
      %v368 = vld [vmem:[%s2 + $0x248] sm:$0xff]
      %v369 = vld [vmem:[%s2 + $0x250] sm:$0xff]
      %v370 = vld [vmem:[%s2 + $0x258] sm:$0xff]
      %v371 = vld [vmem:[%s2 + $0x260] sm:$0xff]
      %v372 = vld [vmem:[%s2 + $0x268] sm:$0xff]
      %v373 = vld [vmem:[%s2 + $0x270] sm:$0xff]
      %v374 = vld [vmem:[%s2 + $0x278] sm:$0xff]
      %v375 = vld [vmem:[%s2 + $0x280] sm:$0xff]
      %v376 = vld [vmem:[%s2 + $0x288] sm:$0xff]
      %v377 = vld [vmem:[%s2 + $0x290] sm:$0xff]
      %v378 = vld [vmem:[%s2 + $0x298] sm:$0xff]
      %v379 = vld [vmem:[%s2 + $0x2a0] sm:$0xff]
      %v380 = vld [vmem:[%s2 + $0x2a8] sm:$0xff]
      %v381 = vld [vmem:[%s2 + $0x2b0] sm:$0xff]
      %v382 = vld [vmem:[%s2 + $0x2b8] sm:$0xff]
      %v383 = vld [vmem:[%s2 + $0x2c0] sm:$0xff]
      %v384 = vld [vmem:[%s2 + $0x2c8] sm:$0xff]
      %v385 = vld [vmem:[%s2 + $0x2d0] sm:$0xff]
      %v386 = vld [vmem:[%s2 + $0x2d8] sm:$0xff]
      %v387 = vld [vmem:[%s2 + $0x2e0] sm:$0xff]
      %v388 = vld [vmem:[%s2 + $0x2e8] sm:$0xff]
      %v389 = vld [vmem:[%s2 + $0x2f0] sm:$0xff]
      %v390 = vld [vmem:[%s2 + $0x2f8] sm:$0xff]
      %v391 = vld [vmem:[%s2 + $0x300] sm:$0xff]
      %v392 = vld [vmem:[%s2 + $0x308] sm:$0xff]
      %v393 = vld [vmem:[%s2 + $0x310] sm:$0xff]
      %v394 = vld [vmem:[%s2 + $0x318] sm:$0xff]
      %v395 = vld [vmem:[%s2 + $0x320] sm:$0xff]
      %v396 = vld [vmem:[%s2 + $0x328] sm:$0xff]
      %v397 = vld [vmem:[%s2 + $0x330] sm:$0xff]
      %v398 = vld [vmem:[%s2 + $0x338] sm:$0xff]
      %v399 = vld [vmem:[%s2 + $0x340] sm:$0xff]
      %v400 = vld [vmem:[%s2 + $0x348] sm:$0xff]
      %v401 = vld [vmem:[%s2 + $0x350] sm:$0xff]
      %v402 = vld [vmem:[%s2 + $0x358] sm:$0xff]
      %v403 = vld [vmem:[%s2 + $0x360] sm:$0xff]
      %v404 = vld [vmem:[%s2 + $0x368] sm:$0xff]
      %v405 = vld [vmem:[%s2 + $0x370] sm:$0xff]
      %v406 = vld [vmem:[%s2 + $0x378] sm:$0xff]
      %v407 = vld [vmem:[%s2 + $0x380] sm:$0xff]
      %v408 = vld [vmem:[%s2 + $0x388] sm:$0xff]
      %v409 = vld [vmem:[%s2 + $0x390] sm:$0xff]
      %v410 = vld [vmem:[%s2 + $0x398] sm:$0xff]
      %v411 = vld [vmem:[%s2 + $0x3a0] sm:$0xff]
      %v412 = vld [vmem:[%s2 + $0x3a8] sm:$0xff]
      %v413 = vld [vmem:[%s2 + $0x3b0] sm:$0xff]
      %v414 = vld [vmem:[%s2 + $0x3b8] sm:$0xff]
      %v415 = vld [vmem:[%s2 + $0x3c0] sm:$0xff]
      %v416 = vld [vmem:[%s2 + $0x3c8] sm:$0xff]
      %v417 = vld [vmem:[%s2 + $0x3d0] sm:$0xff]
      %v418 = vld [vmem:[%s2 + $0x3d8] sm:$0xff]
      %v419 = vld [vmem:[%s2 + $0x3e0] sm:$0xff]
      %v420 = vld [vmem:[%s2 + $0x3e8] sm:$0xff]
      %v421 = vld [vmem:[%s2 + $0x3f0] sm:$0xff]
      %v422 = vld [vmem:[%s2 + $0x3f8] sm:$0xff]
      %v423 = vld [vmem:[%s2 + $0x400] sm:$0xff]
      %v424 = vld [vmem:[%s2 + $0x408] sm:$0xff]
      %v425 = vld [vmem:[%s2 + $0x410] sm:$0xff]
      %v426 = vld [vmem:[%s2 + $0x418] sm:$0xff]
      %v427 = vld [vmem:[%s2 + $0x420] sm:$0xff]
      %v428 = vld [vmem:[%s2 + $0x428] sm:$0xff]
      %v429 = vld [vmem:[%s2 + $0x430] sm:$0xff]
      %v430 = vld [vmem:[%s2 + $0x438] sm:$0xff]
      %v431 = vld [vmem:[%s2 + $0x440] sm:$0xff]
      %v432 = vld [vmem:[%s2 + $0x448] sm:$0xff]
      %v433 = vld [vmem:[%s2 + $0x450] sm:$0xff]
      %v434 = vld [vmem:[%s2 + $0x458] sm:$0xff]
      %v435 = vld [vmem:[%s2 + $0x460] sm:$0xff]
      %v436 = vld [vmem:[%s2 + $0x468] sm:$0xff]
      %v437 = vld [vmem:[%s2 + $0x470] sm:$0xff]
      %v438 = vld [vmem:[%s2 + $0x478] sm:$0xff]
      %v439 = vld [vmem:[%s2 + $0x480] sm:$0xff]
      %v440 = vld [vmem:[%s2 + $0x488] sm:$0xff]
      %v441 = vld [vmem:[%s2 + $0x490] sm:$0xff]
      %v442 = vld [vmem:[%s2 + $0x498] sm:$0xff]
      %v443 = vld [vmem:[%s2 + $0x4a0] sm:$0xff]
      %v444 = vld [vmem:[%s2 + $0x4a8] sm:$0xff]
      %v445 = vld [vmem:[%s2 + $0x4b0] sm:$0xff]
      %v446 = vld [vmem:[%s2 + $0x4b8] sm:$0xff]
      %v447 = vld [vmem:[%s2 + $0x4c0] sm:$0xff]
      %v448 = vld [vmem:[%s2 + $0x4c8] sm:$0xff]
      %v449 = vld [vmem:[%s2 + $0x4d0] sm:$0xff]
      %v450 = vld [vmem:[%s2 + $0x4d8] sm:$0xff]
      %v451 = vld [vmem:[%s2 + $0x4e0] sm:$0xff]
      %v452 = vld [vmem:[%s2 + $0x4e8] sm:$0xff]
      %v453 = vld [vmem:[%s2 + $0x4f0] sm:$0xff]
      %v454 = vld [vmem:[%s2 + $0x4f8] sm:$0xff]
      %v455 = vld [vmem:[%s2 + $0x500] sm:$0xff]
      %v456 = vld [vmem:[%s2 + $0x508] sm:$0xff]
      %v457 = vld [vmem:[%s2 + $0x510] sm:$0xff]
      %v458 = vld [vmem:[%s2 + $0x518] sm:$0xff]
      %v459 = vld [vmem:[%s2 + $0x520] sm:$0xff]
      %v460 = vld [vmem:[%s2 + $0x528] sm:$0xff]
      %v461 = vld [vmem:[%s2 + $0x530] sm:$0xff]
      %v462 = vld [vmem:[%s2 + $0x538] sm:$0xff]
      %vm463 = vcmask 261120
      %v465 = vsel %vm463, %v258, 0
      %v468 = vsel %vm463, %v264, 0
      %v471 = vsel %vm463, %v270, 0
      %v474 = vsel %vm463, %v276, 0
      %v477 = vsel %vm463, %v282, 0
      %v480 = vsel %vm463, %v288, 0
      %v483 = vsel %vm463, %v294, 0
      %485 = vmatprep.subr.mxu0 %v326
      %486 = vmatpush1.msra.mxu0 %v325
      %487 = vmatprep.subr.mxu0 %v324
      %488 = vmatpush1.msra.mxu0 %v323
      %489 = vmatprep.subr.mxu0 %v322
      %490 = vmatpush1.msra.mxu0 %v321
      %491 = vmatprep.subr.mxu0 %v320
      %492 = vmatpush1.msra.mxu0 %v319
      %493 = vmatprep.subr.mxu0 %v318
      %494 = vmatpush1.msra.mxu0 %v317
      %495 = vmatprep.subr.mxu0 %v316
      %496 = vmatpush1.msra.mxu0 %v315
      %497 = vmatprep.subr.mxu0 %v314
      %498 = vmatpush1.msra.mxu0 %v313
      %499 = vmatprep.subr.mxu0 %v312
      %500 = vmatpush1.msra.mxu0 %v311
      %501 = vmatprep.subr.mxu0 %v310
      %502 = vmatpush1.msra.mxu0 %v309
      %503 = vmatprep.subr.mxu0 %v308
      %504 = vmatpush1.msra.mxu0 %v307
      %505 = vmatprep.subr.mxu0 %v306
      %506 = vmatpush1.msra.mxu0 %v305
      %507 = vmatprep.subr.mxu0 %v304
      %508 = vmatpush1.msra.mxu0 %v303
      %509 = vmatprep.subr.mxu0 %v302
      %510 = vmatpush1.msra.mxu0 %v301
      %511 = vmatprep.subr.mxu0 %v300
      %512 = vmatpush1.msra.mxu0 %v299
      %513 = vmatprep.subr.mxu0 %v298
      %514 = vmatpush1.msra.mxu0 %v297
      %515 = vmatprep.subr.mxu0 %v296
      %516 = vmatpush1.msra.mxu0 %v295
      %517 = vmatprep.subr.mxu0 %v358
      %518 = vmatpush2.msra.mxu0 %v357
      %519 = vmatprep.subr.mxu0 %v356
      %520 = vmatpush2.msra.mxu0 %v355
      %521 = vmatprep.subr.mxu0 %v354
      %522 = vmatpush2.msra.mxu0 %v353
      %523 = vmatprep.subr.mxu0 %v352
      %524 = vmatpush2.msra.mxu0 %v351
      %525 = vmatprep.subr.mxu0 %v350
      %526 = vmatpush2.msra.mxu0 %v349
      %527 = vmatprep.subr.mxu0 %v348
      %528 = vmatpush2.msra.mxu0 %v347
      %529 = vmatprep.subr.mxu0 %v346
      %530 = vmatpush2.msra.mxu0 %v345
      %531 = vmatprep.subr.mxu0 %v344
      %532 = vmatpush2.msra.mxu0 %v343
      %533 = vmatprep.subr.mxu0 %v342
      %534 = vmatpush2.msra.mxu0 %v341
      %535 = vmatprep.subr.mxu0 %v340
      %536 = vmatpush2.msra.mxu0 %v339
      %537 = vmatprep.subr.mxu0 %v338
      %538 = vmatpush2.msra.mxu0 %v337
      %539 = vmatprep.subr.mxu0 %v336
      %540 = vmatpush2.msra.mxu0 %v335
      %541 = vmatprep.subr.mxu0 %v334
      %542 = vmatpush2.msra.mxu0 %v333
      %543 = vmatprep.subr.mxu0 %v332
      %544 = vmatpush2.msra.mxu0 %v331
      %545 = vmatprep.subr.mxu0 %v330
      %546 = vmatpush2.msra.mxu0 %v329
      %547 = vmatprep.subr.mxu0 %v328
      %548 = vmatpush2.msra.mxu0 %v327
      %549 = vmatprep.mubr.f32.mxu0 %v254
      %550 = vmatmul.mubr.f32.gmra.mxu0 %v253
      %v551 = vpop.f32.mrf.mxu0
      %v552 = vadd.f32 0.0, %v551
      %v553 = vpop.f32.mrf.mxu0
      %v554 = vadd.f32 0.0, %v553
      %555 = vmatprep.mubr.f32.mxu0 %v260
      %556 = vmatmul.mubr.f32.gmra.mxu0 %v259
      %v557 = vpop.f32.mrf.mxu0
      %v558 = vadd.f32 0.0, %v557
      %v559 = vpop.f32.mrf.mxu0
      %v560 = vadd.f32 0.0, %v559
      %561 = vmatprep.mubr.f32.mxu0 %v266
      %562 = vmatmul.mubr.f32.gmra.mxu0 %v265
      %v563 = vpop.f32.mrf.mxu0
      %v564 = vadd.f32 0.0, %v563
      %v565 = vpop.f32.mrf.mxu0
      %v566 = vadd.f32 0.0, %v565
      %567 = vmatprep.mubr.f32.mxu0 %v272
      %568 = vmatmul.mubr.f32.gmra.mxu0 %v271
      %v569 = vpop.f32.mrf.mxu0
      %v570 = vadd.f32 0.0, %v569
      %v571 = vpop.f32.mrf.mxu0
      %v572 = vadd.f32 0.0, %v571
      %573 = vmatprep.mubr.f32.mxu0 %v278
      %574 = vmatmul.mubr.f32.gmra.mxu0 %v277
      %v575 = vpop.f32.mrf.mxu0
      %v576 = vadd.f32 0.0, %v575
      %v577 = vpop.f32.mrf.mxu0
      %v578 = vadd.f32 0.0, %v577
      %579 = vmatprep.mubr.f32.mxu0 %v284
      %580 = vmatmul.mubr.f32.gmra.mxu0 %v283
      %v581 = vpop.f32.mrf.mxu0
      %v582 = vadd.f32 0.0, %v581
      %v583 = vpop.f32.mrf.mxu0
      %v584 = vadd.f32 0.0, %v583
      %585 = vmatprep.mubr.f32.mxu0 %v290
      %586 = vmatmul.mubr.f32.gmra.mxu0 %v289
      %v587 = vpop.f32.mrf.mxu0
      %v588 = vadd.f32 0.0, %v587
      %v589 = vpop.f32.mrf.mxu0
      %v590 = vadd.f32 0.0, %v589
      %591 = vdwg.mxu0
      %592 = vmatprep.subr.mxu0 %v390
      %593 = vmatpush1.msra.mxu0 %v389
      %594 = vmatprep.subr.mxu0 %v388
      %595 = vmatpush1.msra.mxu0 %v387
      %596 = vmatprep.subr.mxu0 %v386
      %597 = vmatpush1.msra.mxu0 %v385
      %598 = vmatprep.subr.mxu0 %v384
      %599 = vmatpush1.msra.mxu0 %v383
      %600 = vmatprep.subr.mxu0 %v382
      %601 = vmatpush1.msra.mxu0 %v381
      %602 = vmatprep.subr.mxu0 %v380
      %603 = vmatpush1.msra.mxu0 %v379
      %604 = vmatprep.subr.mxu0 %v378
      %605 = vmatpush1.msra.mxu0 %v377
      %606 = vmatprep.subr.mxu0 %v376
      %607 = vmatpush1.msra.mxu0 %v375
      %608 = vmatprep.subr.mxu0 %v374
      %609 = vmatpush1.msra.mxu0 %v373
      %610 = vmatprep.subr.mxu0 %v372
      %611 = vmatpush1.msra.mxu0 %v371
      %612 = vmatprep.subr.mxu0 %v370
      %613 = vmatpush1.msra.mxu0 %v369
      %614 = vmatprep.subr.mxu0 %v368
      %615 = vmatpush1.msra.mxu0 %v367
      %616 = vmatprep.subr.mxu0 %v366
      %617 = vmatpush1.msra.mxu0 %v365
      %618 = vmatprep.subr.mxu0 %v364
      %619 = vmatpush1.msra.mxu0 %v363
      %620 = vmatprep.subr.mxu0 %v362
      %621 = vmatpush1.msra.mxu0 %v361
      %622 = vmatprep.subr.mxu0 %v360
      %623 = vmatpush1.msra.mxu0 %v359
      %624 = vmatprep.subr.mxu0 %v422
      %625 = vmatpush2.msra.mxu0 %v421
      %626 = vmatprep.subr.mxu0 %v420
      %627 = vmatpush2.msra.mxu0 %v419
      %628 = vmatprep.subr.mxu0 %v418
      %629 = vmatpush2.msra.mxu0 %v417
      %630 = vmatprep.subr.mxu0 %v416
      %631 = vmatpush2.msra.mxu0 %v415
      %632 = vmatprep.subr.mxu0 %v414
      %633 = vmatpush2.msra.mxu0 %v413
      %634 = vmatprep.subr.mxu0 %v412
      %635 = vmatpush2.msra.mxu0 %v411
      %636 = vmatprep.subr.mxu0 %v410
      %637 = vmatpush2.msra.mxu0 %v409
      %638 = vmatprep.subr.mxu0 %v408
      %639 = vmatpush2.msra.mxu0 %v407
      %640 = vmatprep.subr.mxu0 %v406
      %641 = vmatpush2.msra.mxu0 %v405
      %642 = vmatprep.subr.mxu0 %v404
      %643 = vmatpush2.msra.mxu0 %v403
      %644 = vmatprep.subr.mxu0 %v402
      %645 = vmatpush2.msra.mxu0 %v401
      %646 = vmatprep.subr.mxu0 %v400
      %647 = vmatpush2.msra.mxu0 %v399
      %648 = vmatprep.subr.mxu0 %v398
      %649 = vmatpush2.msra.mxu0 %v397
      %650 = vmatprep.subr.mxu0 %v396
      %651 = vmatpush2.msra.mxu0 %v395
      %652 = vmatprep.subr.mxu0 %v394
      %653 = vmatpush2.msra.mxu0 %v393
      %654 = vmatprep.subr.mxu0 %v392
      %655 = vmatpush2.msra.mxu0 %v391
      %656 = vmatprep.mubr.f32.mxu0 %v256
      %657 = vmatmul.mubr.f32.gmra.mxu0 %v255
      %v658 = vpop.f32.mrf.mxu0
      %v659 = vadd.f32 %v552, %v658
      %v660 = vpop.f32.mrf.mxu0
      %v661 = vadd.f32 %v554, %v660
      %662 = vmatprep.mubr.f32.mxu0 %v262
      %663 = vmatmul.mubr.f32.gmra.mxu0 %v261
      %v664 = vpop.f32.mrf.mxu0
      %v665 = vadd.f32 %v558, %v664
      %v666 = vpop.f32.mrf.mxu0
      %v667 = vadd.f32 %v560, %v666
      %668 = vmatprep.mubr.f32.mxu0 %v268
      %669 = vmatmul.mubr.f32.gmra.mxu0 %v267
      %v670 = vpop.f32.mrf.mxu0
      %v671 = vadd.f32 %v564, %v670
      %v672 = vpop.f32.mrf.mxu0
      %v673 = vadd.f32 %v566, %v672
      %674 = vmatprep.mubr.f32.mxu0 %v274
      %675 = vmatmul.mubr.f32.gmra.mxu0 %v273
      %v676 = vpop.f32.mrf.mxu0
      %v677 = vadd.f32 %v570, %v676
      %v678 = vpop.f32.mrf.mxu0
      %v679 = vadd.f32 %v572, %v678
      %680 = vmatprep.mubr.f32.mxu0 %v280
      %681 = vmatmul.mubr.f32.gmra.mxu0 %v279
      %v682 = vpop.f32.mrf.mxu0
      %v683 = vadd.f32 %v576, %v682
      %v684 = vpop.f32.mrf.mxu0
      %v685 = vadd.f32 %v578, %v684
      %686 = vmatprep.mubr.f32.mxu0 %v286
      %687 = vmatmul.mubr.f32.gmra.mxu0 %v285
      %v688 = vpop.f32.mrf.mxu0
      %v689 = vadd.f32 %v582, %v688
      %v690 = vpop.f32.mrf.mxu0
      %v691 = vadd.f32 %v584, %v690
      %692 = vmatprep.mubr.f32.mxu0 %v292
      %693 = vmatmul.mubr.f32.gmra.mxu0 %v291
      %v694 = vpop.f32.mrf.mxu0
      %v695 = vadd.f32 %v588, %v694
      %v696 = vpop.f32.mrf.mxu0
      %v697 = vadd.f32 %v590, %v696
      %698 = vdwg.mxu0
      %699 = vmatprep.subr.mxu0 %v454
      %700 = vmatpush1.msra.mxu0 %v453
      %701 = vmatprep.subr.mxu0 %v452
      %702 = vmatpush1.msra.mxu0 %v451
      %703 = vmatprep.subr.mxu0 %v450
      %704 = vmatpush1.msra.mxu0 %v449
      %705 = vmatprep.subr.mxu0 %v448
      %706 = vmatpush1.msra.mxu0 %v447
      %707 = vmatprep.subr.mxu0 %v446
      %708 = vmatpush1.msra.mxu0 %v445
      %709 = vmatprep.subr.mxu0 %v444
      %710 = vmatpush1.msra.mxu0 %v443
      %711 = vmatprep.subr.mxu0 %v442
      %712 = vmatpush1.msra.mxu0 %v441
      %713 = vmatprep.subr.mxu0 %v440
      %714 = vmatpush1.msra.mxu0 %v439
      %715 = vmatprep.subr.mxu0 %v438
      %716 = vmatpush1.msra.mxu0 %v437
      %717 = vmatprep.subr.mxu0 %v436
      %718 = vmatpush1.msra.mxu0 %v435
      %719 = vmatprep.subr.mxu0 %v434
      %720 = vmatpush1.msra.mxu0 %v433
      %721 = vmatprep.subr.mxu0 %v432
      %722 = vmatpush1.msra.mxu0 %v431
      %723 = vmatprep.subr.mxu0 %v430
      %724 = vmatpush1.msra.mxu0 %v429
      %725 = vmatprep.subr.mxu0 %v428
      %726 = vmatpush1.msra.mxu0 %v427
      %727 = vmatprep.subr.mxu0 %v426
      %728 = vmatpush1.msra.mxu0 %v425
      %729 = vmatprep.subr.mxu0 %v424
      %730 = vmatpush1.msra.mxu0 %v423
      %731 = vmatprep.subr.mxu0 0.0
      %732 = vmatpush2.msra.mxu0 0.0
      %733 = vmatprep.subr.mxu0 0.0
      %734 = vmatpush2.msra.mxu0 0.0
      %735 = vmatprep.subr.mxu0 0.0
      %736 = vmatpush2.msra.mxu0 0.0
      %737 = vmatprep.subr.mxu0 0.0
      %738 = vmatpush2.msra.mxu0 0.0
      %739 = vmatprep.subr.mxu0 0.0
      %740 = vmatpush2.msra.mxu0 0.0
      %741 = vmatprep.subr.mxu0 0.0
      %742 = vmatpush2.msra.mxu0 0.0
      %743 = vmatprep.subr.mxu0 0.0
      %744 = vmatpush2.msra.mxu0 0.0
      %745 = vmatprep.subr.mxu0 0.0
      %746 = vmatpush2.msra.mxu0 0.0
      %747 = vmatprep.subr.mxu0 0.0
      %748 = vmatpush2.msra.mxu0 0.0
      %749 = vmatprep.subr.mxu0 0.0
      %750 = vmatpush2.msra.mxu0 0.0
      %751 = vmatprep.subr.mxu0 0.0
      %752 = vmatpush2.msra.mxu0 0.0
      %753 = vmatprep.subr.mxu0 0.0
      %754 = vmatpush2.msra.mxu0 0.0
      %755 = vmatprep.subr.mxu0 %v462
      %756 = vmatpush2.msra.mxu0 %v461
      %757 = vmatprep.subr.mxu0 %v460
      %758 = vmatpush2.msra.mxu0 %v459
      %759 = vmatprep.subr.mxu0 %v458
      %760 = vmatpush2.msra.mxu0 %v457
      %761 = vmatprep.subr.mxu0 %v456
      %762 = vmatpush2.msra.mxu0 %v455
      %763 = vmatprep.mubr.f32.mxu0 %v465
      %764 = vmatmul.mubr.f32.gmra.mxu0 %v257
      %v765 = vpop.f32.mrf.mxu0
      %v766 = vadd.f32 %v659, %v765
      %v767 = vpop.f32.mrf.mxu0
      %v768 = vadd.f32 %v661, %v767
      %769 = vmatprep.mubr.f32.mxu0 %v468
      %770 = vmatmul.mubr.f32.gmra.mxu0 %v263
      %v771 = vpop.f32.mrf.mxu0
      %v772 = vadd.f32 %v665, %v771
      %v773 = vpop.f32.mrf.mxu0
      %v774 = vadd.f32 %v667, %v773
      %775 = vmatprep.mubr.f32.mxu0 %v471
      %776 = vmatmul.mubr.f32.gmra.mxu0 %v269
      %v777 = vpop.f32.mrf.mxu0
      %v778 = vadd.f32 %v671, %v777
      %v779 = vpop.f32.mrf.mxu0
      %v780 = vadd.f32 %v673, %v779
      %781 = vmatprep.mubr.f32.mxu0 %v474
      %782 = vmatmul.mubr.f32.gmra.mxu0 %v275
      %v783 = vpop.f32.mrf.mxu0
      %v784 = vadd.f32 %v677, %v783
      %v785 = vpop.f32.mrf.mxu0
      %v786 = vadd.f32 %v679, %v785
      %787 = vmatprep.mubr.f32.mxu0 %v477
      %788 = vmatmul.mubr.f32.gmra.mxu0 %v281
      %v789 = vpop.f32.mrf.mxu0
      %v790 = vadd.f32 %v683, %v789
      %v791 = vpop.f32.mrf.mxu0
      %v792 = vadd.f32 %v685, %v791
      %793 = vmatprep.mubr.f32.mxu0 %v480
      %794 = vmatmul.mubr.f32.gmra.mxu0 %v287
      %v795 = vpop.f32.mrf.mxu0
      %v796 = vadd.f32 %v689, %v795
      %v797 = vpop.f32.mrf.mxu0
      %v798 = vadd.f32 %v691, %v797
      %799 = vmatprep.mubr.f32.mxu0 %v483
      %800 = vmatmul.mubr.f32.gmra.mxu0 %v293
      %v801 = vpop.f32.mrf.mxu0
      %v802 = vadd.f32 %v695, %v801
      %v803 = vpop.f32.mrf.mxu0
      %v804 = vadd.f32 %v697, %v803
      %805 = vdwg.mxu0
      %806 = vst [vmem:[%s177] sm:$0xff] %v766
      %vm807 = vcmask 556032
      %808 = vst.msk [vmem:[%s177 + $0x8] sm:$0xff] %vm807, %v768
      %809 = vst [vmem:[%s177 + $0x10] sm:$0xff] %v772
      %810 = vst.msk [vmem:[%s177 + $0x18] sm:$0xff] %vm807, %v774
      %811 = vst [vmem:[%s177 + $0x20] sm:$0xff] %v778
      %812 = vst.msk [vmem:[%s177 + $0x28] sm:$0xff] %vm807, %v780
      %813 = vst [vmem:[%s177 + $0x30] sm:$0xff] %v784
      %814 = vst.msk [vmem:[%s177 + $0x38] sm:$0xff] %vm807, %v786
      %815 = vst [vmem:[%s177 + $0x40] sm:$0xff] %v790
      %816 = vst.msk [vmem:[%s177 + $0x48] sm:$0xff] %vm807, %v792
      %817 = vst [vmem:[%s177 + $0x50] sm:$0xff] %v796
      %818 = vst.msk [vmem:[%s177 + $0x58] sm:$0xff] %vm807, %v798
      %819 = vst [vmem:[%s177 + $0x60] sm:$0xff] %v802
      %820 = vst.msk [vmem:[%s177 + $0x68] sm:$0xff] %vm807, %v804
      %s821 = smul.u32 7, %s14
      %p822 = scmp.lt.s32.totalorder %s821, 13
      %s823 = scalar_select %p822, %s821, 13
      %s824 = smul.addr %s823, 2
      %s825 = smul.addr %s824, 8
      %s826 = scalar_lea.vmem %s3, %s825
      // Predicated region
      $region33: #{tpu_custom_call.1} parent=31 // pred_check
        %p827 = pneg %p100
      $region34: #{tpu_custom_call.1} parent=31 // pred_check_branch
        %829 = sbr.rel (%p827) target = $region36
      $region35: #{tpu_custom_call.1} parent=31 // pred_region
        %s830 = smul.u32 7, %s14
      $region36: #{tpu_custom_call.1} parent=31 // pred_fallthru
        _
    $region32: #{tpu_custom_call.1} parent=5 // pred_fallthru
      _
    %p831 = scmp.le.s32.totalorder 2, %s9
    // Predicated region
    $region37: #{tpu_custom_call.1} parent=5 // pred_check
      %p832 = pneg %p831
    $region38: #{tpu_custom_call.1} parent=5 // pred_check_branch
      %834 = sbr.rel (%p832) target = $region40
    $region39: #{tpu_custom_call.1} parent=5 // pred_region
      %s835 = ssub.s32 %s9, 2
      // Predicated region
      $region41: #{tpu_custom_call.1} parent=39 // pred_check
        %p836 = pneg %p106
      $region42: #{tpu_custom_call.1} parent=39 // pred_check_branch
        %838 = sbr.rel (%p836) target = $region44
      $region43: #{tpu_custom_call.1} parent=39 // pred_region
        %s839 = smul.u32 7, %s15
        %p840 = scmp.lt.s32.totalorder %s839, 13
        %s841 = scalar_select %p840, %s839, 13
        %s842 = smul.addr %s841, 2
        %s843 = smul.addr %s842, 8
        %s844 = scalar_lea.vmem %s3, %s843
      $region44: #{tpu_custom_call.1} parent=39 // pred_fallthru
        _
    $region40: #{tpu_custom_call.1} parent=5 // pred_fallthru
      _
  $region6: #{tpu_custom_call.1} parent=0 // loop_footer
    %s13 = sadd.s32 1, %s9
  $region7: #{tpu_custom_call.1} parent=0 // loop_footer_branch
    %8 = sbr.rel target = $region3
  $region8: #{tpu_custom_call.1} parent=0 // loop_exit
    _

</llo_original>
